<compile_context>
chip_gen: v5e
topology: v5e:2x2
jax: 0.10.0
libtpu: 0.0.40
codegen_flags: <defaults>
</compile_context>

<pallas_src>
import functools

import jax
import jax.numpy as jnp
from jax import lax
from jax.experimental import pallas as pl
from jax.experimental.pallas import tpu as pltpu


def _round_up(n, m):
    return ((n + m - 1) // m) * m


def _vmem_limit_bytes():
    # v7x: 64 MiB/TC -> leave headroom (~48 MiB); v5e/v6e: 128 MiB -> ~100 MiB.
    try:
        cap = int(pltpu.get_tpu_info().vmem_capacity_bytes)
    except Exception:
        cap = 64 * 1024 * 1024
    return max(32 * 1024 * 1024, min(cap - 16 * 1024 * 1024, 100 * 1024 * 1024))


def _condconv_bn_relu_kernel(tap_groups, Wp, tile_n, cin, pack, n_tiles,
                             w_ref,      # (n_groups, Cout, pack*Cin) bf16
                             x_ref,      # (Cin, l_in)    bf16 flat padded image
                             scale_ref,  # (Cout, 1)      f32 BN scale
                             bias_ref,   # (Cout, 1)      f32 BN bias
                             out_ref,    # (Cout, tile_n) bf16
                             acc_ref,    # VMEM (Cout, tile_n) f32
                             *maybe_xpack):
    xpack_ref = maybe_xpack[0] if maybe_xpack else None
    static_base = (n_tiles == 1)
    base = pl.program_id(1) * tile_n          # multiple of 128 (tile_n is)

    def load_tap(s):
        # Decompose the flat spatial shift into a 128-aligned (dynamic) start
        # plus a small static lane offset, so the dynamic part is pure
        # addressing and only the static remainder needs a lane shift.
        s_al = (s // 128) * 128
        r = s - s_al
        win = tile_n if r == 0 else tile_n + 128
        if static_base:
            v = x_ref[:, s_al:s_al + win]
        else:
            start = pl.multiple_of(base + s_al, 128)
            v = x_ref[:, pl.ds(start, win)]
        return v if r == 0 else v[:, r:r + tile_n]

    # Implicit GEMM over kernel taps, `pack` taps fused per MXU contraction.
    for g, group in enumerate(tap_groups):
        if pack > 1:
            for p, (kh, kw) in enumerate(group):
                xpack_ref[p * cin:(p + 1) * cin, :] = load_tap(kh * Wp + kw)
            rhs = xpack_ref[...]
        else:
            (kh, kw), = group
            rhs = load_tap(kh * Wp + kw)
        part = jnp.dot(w_ref[g], rhs, preferred_element_type=jnp.float32)
        if g == 0:
            acc_ref[...] = part
        else:
            acc_ref[...] += part

    # BatchNorm (inference) + ReLU epilogue in f32; cast only at the store.
    y = acc_ref[...] * scale_ref[...] + bias_ref[...]
    out_ref[...] = jnp.maximum(y, 0.0).astype(out_ref.dtype)


def cond_conv_bn_relu(x, routing_weights, expert_w, gamma, beta,
                      running_mean, running_var, eps=1e-5,
                      tile_n_target=512, out_dtype=jnp.bfloat16):
    """x: (B, Cin, H, W) NCHW.  Returns (B, Cout, H, W) NCHW (out_dtype)."""
    B, Cin, H, W = x.shape
    E, Cout, Cin_w, K, K2 = expert_w.shape
    assert Cin_w == Cin and K == K2 and K % 2 == 1
    pad = (K - 1) // 2                                   # auto_pad(k, d=1), stride=1
    Hp, Wp = H + 2 * pad, W + 2 * pad
    KK = K * K

    # Spatial tiling of the flat (row-major, padded-width) output grid.
    tile_n = _round_up(min(tile_n_target, _round_up(H * Wp, 128)), 128)
    n_out = _round_up(H * Wp, tile_n)
    n_tiles = n_out // tile_n
    s_max = (K - 1) * Wp + (K - 1)
    halo = ((s_max // 128) + 1) * 128                    # room for aligned+halo loads
    l_in = n_out + halo
    assert l_in >= Hp * Wp

    # Tap packing: fill the MXU contraction (256-wide on v6e/v7x) by fusing
    # several taps into one matmul.  Requires Cin % 8 == 0 so packed scratch
    # writes stay sublane aligned; otherwise fall back to one tap per matmul.
    if Cin % 8 == 0:
        pack = max(p for p in range(1, KK + 1) if KK % p == 0 and p * Cin <= 256)
    else:
        pack = 1
    n_groups = KK // pack
    taps = [(kh, kw) for kh in range(K) for kw in range(K)]
    tap_groups = [taps[g * pack:(g + 1) * pack] for g in range(n_groups)]

    # ---- input: cast to bf16 first (halves pad traffic), pad, flatten -------
    x_bf = x.astype(jnp.bfloat16)
    xp = jnp.pad(x_bf, ((0, 0), (0, 0), (pad, pad), (pad, pad)))     # (B,Cin,Hp,Wp)
    x_flat = jnp.pad(xp.reshape(B, Cin, Hp * Wp),
                     ((0, 0), (0, 0), (0, l_in - Hp * Wp)))

    # ---- weights: mix experts on the MXU (XLA), emit tap layout directly ----
    mixed = jnp.einsum('be,eoikl->bkloi',
                       routing_weights.astype(jnp.bfloat16),
                       expert_w.astype(jnp.bfloat16),
                       preferred_element_type=jnp.float32)           # (B,K,K,Cout,Cin)
    w_taps = mixed.reshape(B, n_groups, pack, Cout, Cin)
    w_taps = jnp.transpose(w_taps, (0, 1, 3, 2, 4))                  # (B,g,Cout,pack,Cin)
    w_taps = w_taps.reshape(B, n_groups, Cout, pack * Cin).astype(jnp.bfloat16)

    # ---- BatchNorm (inference) scale/bias, applied in the f32 epilogue ------
    scale = (gamma / jnp.sqrt(running_var + eps)).astype(jnp.float32)
    bias = (beta - running_mean * scale).astype(jnp.float32)
    scale = scale.reshape(Cout, 1)
    bias = bias.reshape(Cout, 1)

    kernel = functools.partial(_condconv_bn_relu_kernel,
                               tap_groups, Wp, tile_n, Cin, pack, n_tiles)

    scratch = [pltpu.VMEM((Cout, tile_n), jnp.float32)]
    if pack > 1:
        scratch.append(pltpu.VMEM((pack * Cin, tile_n), jnp.bfloat16))

    out = pl.pallas_call(
        kernel,
        out_shape=jax.ShapeDtypeStruct((B, Cout, n_out), out_dtype),
        grid=(B, n_tiles),
        in_specs=[
            # weight / x block indices independent of t -> no re-DMA across tiles
            pl.BlockSpec((None, n_groups, Cout, pack * Cin), lambda b, t: (b, 0, 0, 0)),
            pl.BlockSpec((None, Cin, l_in), lambda b, t: (b, 0, 0)),
            pl.BlockSpec((Cout, 1), lambda b, t: (0, 0)),
            pl.BlockSpec((Cout, 1), lambda b, t: (0, 0)),
        ],
        out_specs=pl.BlockSpec((None, Cout, tile_n), lambda b, t: (b, 0, t)),
        scratch_shapes=scratch,
        compiler_params=pltpu.CompilerParams(
            dimension_semantics=("parallel", "parallel"),
            vmem_limit_bytes=_vmem_limit_bytes()),
    )(w_taps, x_flat, scale, bias)

    # (B, Cout, n_out) -> crop garbage columns -> NCHW (no transpose needed).
    out = out[:, :, :H * Wp].reshape(B, Cout, H, Wp)[:, :, :, :W]
    return out


def _reference(x, routing_weights, expert_w, gamma, beta,
               running_mean, running_var, eps=1e-5):
    """Pure-JAX f32 reference with the module's semantics (sanity check)."""
    mixed = jnp.einsum('be,eoikl->boikl', routing_weights, expert_w)

    def conv_one(xb, wb):
        return lax.conv_general_dilated(
            xb[None], wb, window_strides=(1, 1), padding='SAME',
            dimension_numbers=('NCHW', 'OIHW', 'NCHW'),
            precision=lax.Precision.HIGHEST)[0]

    y = jax.vmap(conv_one)(x, mixed)                                 # (B,Cout,H,W)
    inv = gamma / jnp.sqrt(running_var + eps)
    y = y * inv.reshape(1, -1, 1, 1) + (beta - running_mean * inv).reshape(1, -1, 1, 1)
    return jnp.maximum(y, 0.0)


def _run_case(key, B, Cin, Cout, H, W, K, E):
    k1, k2, k3, k4, k5, k6, k7 = jax.random.split(key, 7)
    x = jax.random.normal(k1, (B, Cin, H, W), jnp.float32)
    # routing weights for the CondConv path (shared within a residual block)
    routing = jax.nn.softmax(jax.random.normal(k2, (B, E), jnp.float32), axis=-1)
    # CondConv expert weights: (num_experts, out_chans, in_chans, K, K), bias=False
    expert_w = 0.1 * jax.random.normal(k3, (E, Cout, Cin, K, K), jnp.float32)
    # BatchNorm2d(out_chans) parameters + running stats (deterministic init)
    gamma = 1.0 + 0.1 * jax.random.normal(k4, (Cout,), jnp.float32)
    beta = 0.1 * jax.random.normal(k5, (Cout,), jnp.float32)
    running_mean = 0.1 * jax.random.normal(k6, (Cout,), jnp.float32)
    running_var = jnp.abs(jax.random.normal(k7, (Cout,), jnp.float32)) + 0.5

    out = cond_conv_bn_relu(x, routing, expert_w, gamma, beta,
                            running_mean, running_var)
    out = jax.block_until_ready(out)
    assert out.shape == (B, Cout, H, W)

    ref = _reference(x, routing, expert_w, gamma, beta, running_mean, running_var)
    out_f32 = out.astype(jnp.float32)
    err = float(jnp.max(jnp.abs(out_f32 - ref)))
    # bf16 MXU operands / bf16 output vs f32/HIGHEST reference -> loose tol.
    assert jnp.allclose(out_f32, ref, atol=5e-2, rtol=5e-2), err


if __name__ == "__main__":
    key = jax.random.PRNGKey(0)
    ka, kb = jax.random.split(key)
    # Per-tap path (Cin not a multiple of 8 -> no tap packing), single tile.
    _run_case(ka, B=2, Cin=4, Cout=8, H=16, W=16, K=3, E=8)
    # Packed-tap path (Cin % 8 == 0 -> 9 taps fused) + multi-tile spatial grid.
    _run_case(kb, B=2, Cin=8, Cout=16, H=32, W=32, K=3, E=8)
    print("KERNEL_OK")
</pallas_src>

<mosaic_0001>
module attributes {stable_mosaic.version = 11 : i64} {
  func.func @_condconv_bn_relu_kernel(%arg0: i32, %arg1: i32, %arg2: memref<1x9x8x4xbf16, #tpu.memory_space<vmem>>, %arg3: memref<1x4x512xbf16, #tpu.memory_space<vmem>>, %arg4: memref<8x1xf32, #tpu.memory_space<vmem>>, %arg5: memref<8x1xf32, #tpu.memory_space<vmem>>, %arg6: memref<1x8x384xbf16, #tpu.memory_space<vmem>>, %arg7: memref<8x384xf32, #tpu.memory_space<vmem>>) attributes {dimension_semantics = [#tpu.dimension_semantics<parallel>, #tpu.dimension_semantics<parallel>], iteration_bounds = array<i64: 2, 1>, scalar_prefetch = 0 : i64, scratch_operands = 1 : i64, tpu.core_type = #tpu.core_type<tc>, window_params = [{transform_indices = @transform_0, window_bounds = array<i64: 1, 9, 8, 4>}, {transform_indices = @transform_1, window_bounds = array<i64: 1, 4, 512>}, {pipeline_mode = #tpu.pipeline_mode<synchronous>, transform_indices = @transform_2, window_bounds = array<i64: 8, 1>}, {pipeline_mode = #tpu.pipeline_mode<synchronous>, transform_indices = @transform_3, window_bounds = array<i64: 8, 1>}, {transform_indices = @transform_4, window_bounds = array<i64: 1, 8, 384>}]} {
    %c0 = arith.constant 0 : index
    %c0_0 = arith.constant 0 : index
    %c0_1 = arith.constant 0 : index
    %0 = vector.load %arg3[%c0, %c0_0, %c0_1] : memref<1x4x512xbf16, #tpu.memory_space<vmem>>, vector<1x4x384xbf16>
    %1 = vector.shape_cast %0 : vector<1x4x384xbf16> to vector<4x384xbf16>
    %c0_2 = arith.constant 0 : index
    %c0_3 = arith.constant 0 : index
    %c0_4 = arith.constant 0 : index
    %c0_5 = arith.constant 0 : index
    %2 = vector.load %arg2[%c0_2, %c0_3, %c0_4, %c0_5] : memref<1x9x8x4xbf16, #tpu.memory_space<vmem>>, vector<1x1x8x4xbf16>
    %3 = vector.shape_cast %2 : vector<1x1x8x4xbf16> to vector<8x4xbf16>
    %cst = arith.constant dense<0.000000e+00> : vector<8x384xf32>
    %4 = tpu.matmul %3, %1, %cst {dimension_numbers = #tpu.dot_dimension_numbers<[1], [0], [0], [1], [0, 0, 1, 1], [], []>} : vector<8x4xbf16>, vector<4x384xbf16>, vector<8x384xf32> -> vector<8x384xf32>
    %c0_6 = arith.constant 0 : index
    %c0_7 = arith.constant 0 : index
    %5 = vector.load %arg7[%c0_6, %c0_7] : memref<8x384xf32, #tpu.memory_space<vmem>>, vector<8x384xf32>
    tpu.vector_store %arg7[%c0_6, %c0_7], %4 {strides = array<i32>} : memref<8x384xf32, #tpu.memory_space<vmem>>, vector<8x384xf32>,
    %c0_8 = arith.constant 0 : index
    %c0_9 = arith.constant 0 : index
    %c0_10 = arith.constant 0 : index
    %6 = vector.load %arg3[%c0_8, %c0_9, %c0_10] : memref<1x4x512xbf16, #tpu.memory_space<vmem>>, vector<1x4x512xbf16>
    %7 = vector.shape_cast %6 : vector<1x4x512xbf16> to vector<4x512xbf16>
    %8 = vector.extract_strided_slice %7 {offsets = [0, 1], sizes = [4, 384], strides = [1, 1]} : vector<4x512xbf16> to vector<4x384xbf16>
    %c0_11 = arith.constant 0 : index
    %c1 = arith.constant 1 : index
    %c0_12 = arith.constant 0 : index
    %c0_13 = arith.constant 0 : index
    %9 = vector.load %arg2[%c0_11, %c1, %c0_12, %c0_13] : memref<1x9x8x4xbf16, #tpu.memory_space<vmem>>, vector<1x1x8x4xbf16>
    %10 = vector.shape_cast %9 : vector<1x1x8x4xbf16> to vector<8x4xbf16>
    %cst_14 = arith.constant dense<0.000000e+00> : vector<8x384xf32>
    %11 = tpu.matmul %10, %8, %cst_14 {dimension_numbers = #tpu.dot_dimension_numbers<[1], [0], [0], [1], [0, 0, 1, 1], [], []>} : vector<8x4xbf16>, vector<4x384xbf16>, vector<8x384xf32> -> vector<8x384xf32>
    %c0_15 = arith.constant 0 : index
    %c0_16 = arith.constant 0 : index
    %12 = vector.load %arg7[%c0_15, %c0_16] : memref<8x384xf32, #tpu.memory_space<vmem>>, vector<8x384xf32>
    %13 = arith.addf %12, %11 : vector<8x384xf32>
    %c0_17 = arith.constant 0 : index
    %c0_18 = arith.constant 0 : index
    %14 = vector.load %arg7[%c0_17, %c0_18] : memref<8x384xf32, #tpu.memory_space<vmem>>, vector<8x384xf32>
    tpu.vector_store %arg7[%c0_17, %c0_18], %13 {strides = array<i32>} : memref<8x384xf32, #tpu.memory_space<vmem>>, vector<8x384xf32>,
    %c0_19 = arith.constant 0 : index
    %c0_20 = arith.constant 0 : index
    %c0_21 = arith.constant 0 : index
    %15 = vector.load %arg3[%c0_19, %c0_20, %c0_21] : memref<1x4x512xbf16, #tpu.memory_space<vmem>>, vector<1x4x512xbf16>
    %16 = vector.shape_cast %15 : vector<1x4x512xbf16> to vector<4x512xbf16>
    %17 = vector.extract_strided_slice %16 {offsets = [0, 2], sizes = [4, 384], strides = [1, 1]} : vector<4x512xbf16> to vector<4x384xbf16>
    %c0_22 = arith.constant 0 : index
    %c2 = arith.constant 2 : index
    %c0_23 = arith.constant 0 : index
    %c0_24 = arith.constant 0 : index
    %18 = vector.load %arg2[%c0_22, %c2, %c0_23, %c0_24] : memref<1x9x8x4xbf16, #tpu.memory_space<vmem>>, vector<1x1x8x4xbf16>
    %19 = vector.shape_cast %18 : vector<1x1x8x4xbf16> to vector<8x4xbf16>
    %cst_25 = arith.constant dense<0.000000e+00> : vector<8x384xf32>
    %20 = tpu.matmul %19, %17, %cst_25 {dimension_numbers = #tpu.dot_dimension_numbers<[1], [0], [0], [1], [0, 0, 1, 1], [], []>} : vector<8x4xbf16>, vector<4x384xbf16>, vector<8x384xf32> -> vector<8x384xf32>
    %c0_26 = arith.constant 0 : index
    %c0_27 = arith.constant 0 : index
    %21 = vector.load %arg7[%c0_26, %c0_27] : memref<8x384xf32, #tpu.memory_space<vmem>>, vector<8x384xf32>
    %22 = arith.addf %21, %20 : vector<8x384xf32>
    %c0_28 = arith.constant 0 : index
    %c0_29 = arith.constant 0 : index
    %23 = vector.load %arg7[%c0_28, %c0_29] : memref<8x384xf32, #tpu.memory_space<vmem>>, vector<8x384xf32>
    tpu.vector_store %arg7[%c0_28, %c0_29], %22 {strides = array<i32>} : memref<8x384xf32, #tpu.memory_space<vmem>>, vector<8x384xf32>,
    %c0_30 = arith.constant 0 : index
    %c0_31 = arith.constant 0 : index
    %c0_32 = arith.constant 0 : index
    %24 = vector.load %arg3[%c0_30, %c0_31, %c0_32] : memref<1x4x512xbf16, #tpu.memory_space<vmem>>, vector<1x4x512xbf16>
    %25 = vector.shape_cast %24 : vector<1x4x512xbf16> to vector<4x512xbf16>
    %26 = vector.extract_strided_slice %25 {offsets = [0, 18], sizes = [4, 384], strides = [1, 1]} : vector<4x512xbf16> to vector<4x384xbf16>
    %c0_33 = arith.constant 0 : index
    %c3 = arith.constant 3 : index
    %c0_34 = arith.constant 0 : index
    %c0_35 = arith.constant 0 : index
    %27 = vector.load %arg2[%c0_33, %c3, %c0_34, %c0_35] : memref<1x9x8x4xbf16, #tpu.memory_space<vmem>>, vector<1x1x8x4xbf16>
    %28 = vector.shape_cast %27 : vector<1x1x8x4xbf16> to vector<8x4xbf16>
    %cst_36 = arith.constant dense<0.000000e+00> : vector<8x384xf32>
    %29 = tpu.matmul %28, %26, %cst_36 {dimension_numbers = #tpu.dot_dimension_numbers<[1], [0], [0], [1], [0, 0, 1, 1], [], []>} : vector<8x4xbf16>, vector<4x384xbf16>, vector<8x384xf32> -> vector<8x384xf32>
    %c0_37 = arith.constant 0 : index
    %c0_38 = arith.constant 0 : index
    %30 = vector.load %arg7[%c0_37, %c0_38] : memref<8x384xf32, #tpu.memory_space<vmem>>, vector<8x384xf32>
    %31 = arith.addf %30, %29 : vector<8x384xf32>
    %c0_39 = arith.constant 0 : index
    %c0_40 = arith.constant 0 : index
    %32 = vector.load %arg7[%c0_39, %c0_40] : memref<8x384xf32, #tpu.memory_space<vmem>>, vector<8x384xf32>
    tpu.vector_store %arg7[%c0_39, %c0_40], %31 {strides = array<i32>} : memref<8x384xf32, #tpu.memory_space<vmem>>, vector<8x384xf32>,
    %c0_41 = arith.constant 0 : index
    %c0_42 = arith.constant 0 : index
    %c0_43 = arith.constant 0 : index
    %33 = vector.load %arg3[%c0_41, %c0_42, %c0_43] : memref<1x4x512xbf16, #tpu.memory_space<vmem>>, vector<1x4x512xbf16>
    %34 = vector.shape_cast %33 : vector<1x4x512xbf16> to vector<4x512xbf16>
    %35 = vector.extract_strided_slice %34 {offsets = [0, 19], sizes = [4, 384], strides = [1, 1]} : vector<4x512xbf16> to vector<4x384xbf16>
    %c0_44 = arith.constant 0 : index
    %c4 = arith.constant 4 : index
    %c0_45 = arith.constant 0 : index
    %c0_46 = arith.constant 0 : index
    %36 = vector.load %arg2[%c0_44, %c4, %c0_45, %c0_46] : memref<1x9x8x4xbf16, #tpu.memory_space<vmem>>, vector<1x1x8x4xbf16>
    %37 = vector.shape_cast %36 : vector<1x1x8x4xbf16> to vector<8x4xbf16>
    %cst_47 = arith.constant dense<0.000000e+00> : vector<8x384xf32>
    %38 = tpu.matmul %37, %35, %cst_47 {dimension_numbers = #tpu.dot_dimension_numbers<[1], [0], [0], [1], [0, 0, 1, 1], [], []>} : vector<8x4xbf16>, vector<4x384xbf16>, vector<8x384xf32> -> vector<8x384xf32>
    %c0_48 = arith.constant 0 : index
    %c0_49 = arith.constant 0 : index
    %39 = vector.load %arg7[%c0_48, %c0_49] : memref<8x384xf32, #tpu.memory_space<vmem>>, vector<8x384xf32>
    %40 = arith.addf %39, %38 : vector<8x384xf32>
    %c0_50 = arith.constant 0 : index
    %c0_51 = arith.constant 0 : index
    %41 = vector.load %arg7[%c0_50, %c0_51] : memref<8x384xf32, #tpu.memory_space<vmem>>, vector<8x384xf32>
    tpu.vector_store %arg7[%c0_50, %c0_51], %40 {strides = array<i32>} : memref<8x384xf32, #tpu.memory_space<vmem>>, vector<8x384xf32>,
    %c0_52 = arith.constant 0 : index
    %c0_53 = arith.constant 0 : index
    %c0_54 = arith.constant 0 : index
    %42 = vector.load %arg3[%c0_52, %c0_53, %c0_54] : memref<1x4x512xbf16, #tpu.memory_space<vmem>>, vector<1x4x512xbf16>
    %43 = vector.shape_cast %42 : vector<1x4x512xbf16> to vector<4x512xbf16>
    %44 = vector.extract_strided_slice %43 {offsets = [0, 20], sizes = [4, 384], strides = [1, 1]} : vector<4x512xbf16> to vector<4x384xbf16>
    %c0_55 = arith.constant 0 : index
    %c5 = arith.constant 5 : index
    %c0_56 = arith.constant 0 : index
    %c0_57 = arith.constant 0 : index
    %45 = vector.load %arg2[%c0_55, %c5, %c0_56, %c0_57] : memref<1x9x8x4xbf16, #tpu.memory_space<vmem>>, vector<1x1x8x4xbf16>
    %46 = vector.shape_cast %45 : vector<1x1x8x4xbf16> to vector<8x4xbf16>
    %cst_58 = arith.constant dense<0.000000e+00> : vector<8x384xf32>
    %47 = tpu.matmul %46, %44, %cst_58 {dimension_numbers = #tpu.dot_dimension_numbers<[1], [0], [0], [1], [0, 0, 1, 1], [], []>} : vector<8x4xbf16>, vector<4x384xbf16>, vector<8x384xf32> -> vector<8x384xf32>
    %c0_59 = arith.constant 0 : index
    %c0_60 = arith.constant 0 : index
    %48 = vector.load %arg7[%c0_59, %c0_60] : memref<8x384xf32, #tpu.memory_space<vmem>>, vector<8x384xf32>
    %49 = arith.addf %48, %47 : vector<8x384xf32>
    %c0_61 = arith.constant 0 : index
    %c0_62 = arith.constant 0 : index
    %50 = vector.load %arg7[%c0_61, %c0_62] : memref<8x384xf32, #tpu.memory_space<vmem>>, vector<8x384xf32>
    tpu.vector_store %arg7[%c0_61, %c0_62], %49 {strides = array<i32>} : memref<8x384xf32, #tpu.memory_space<vmem>>, vector<8x384xf32>,
    %c0_63 = arith.constant 0 : index
    %c0_64 = arith.constant 0 : index
    %c0_65 = arith.constant 0 : index
    %51 = vector.load %arg3[%c0_63, %c0_64, %c0_65] : memref<1x4x512xbf16, #tpu.memory_space<vmem>>, vector<1x4x512xbf16>
    %52 = vector.shape_cast %51 : vector<1x4x512xbf16> to vector<4x512xbf16>
    %53 = vector.extract_strided_slice %52 {offsets = [0, 36], sizes = [4, 384], strides = [1, 1]} : vector<4x512xbf16> to vector<4x384xbf16>
    %c0_66 = arith.constant 0 : index
    %c6 = arith.constant 6 : index
    %c0_67 = arith.constant 0 : index
    %c0_68 = arith.constant 0 : index
    %54 = vector.load %arg2[%c0_66, %c6, %c0_67, %c0_68] : memref<1x9x8x4xbf16, #tpu.memory_space<vmem>>, vector<1x1x8x4xbf16>
    %55 = vector.shape_cast %54 : vector<1x1x8x4xbf16> to vector<8x4xbf16>
    %cst_69 = arith.constant dense<0.000000e+00> : vector<8x384xf32>
    %56 = tpu.matmul %55, %53, %cst_69 {dimension_numbers = #tpu.dot_dimension_numbers<[1], [0], [0], [1], [0, 0, 1, 1], [], []>} : vector<8x4xbf16>, vector<4x384xbf16>, vector<8x384xf32> -> vector<8x384xf32>
    %c0_70 = arith.constant 0 : index
    %c0_71 = arith.constant 0 : index
    %57 = vector.load %arg7[%c0_70, %c0_71] : memref<8x384xf32, #tpu.memory_space<vmem>>, vector<8x384xf32>
    %58 = arith.addf %57, %56 : vector<8x384xf32>
    %c0_72 = arith.constant 0 : index
    %c0_73 = arith.constant 0 : index
    %59 = vector.load %arg7[%c0_72, %c0_73] : memref<8x384xf32, #tpu.memory_space<vmem>>, vector<8x384xf32>
    tpu.vector_store %arg7[%c0_72, %c0_73], %58 {strides = array<i32>} : memref<8x384xf32, #tpu.memory_space<vmem>>, vector<8x384xf32>,
    %c0_74 = arith.constant 0 : index
    %c0_75 = arith.constant 0 : index
    %c0_76 = arith.constant 0 : index
    %60 = vector.load %arg3[%c0_74, %c0_75, %c0_76] : memref<1x4x512xbf16, #tpu.memory_space<vmem>>, vector<1x4x512xbf16>
    %61 = vector.shape_cast %60 : vector<1x4x512xbf16> to vector<4x512xbf16>
    %62 = vector.extract_strided_slice %61 {offsets = [0, 37], sizes = [4, 384], strides = [1, 1]} : vector<4x512xbf16> to vector<4x384xbf16>
    %c0_77 = arith.constant 0 : index
    %c7 = arith.constant 7 : index
    %c0_78 = arith.constant 0 : index
    %c0_79 = arith.constant 0 : index
    %63 = vector.load %arg2[%c0_77, %c7, %c0_78, %c0_79] : memref<1x9x8x4xbf16, #tpu.memory_space<vmem>>, vector<1x1x8x4xbf16>
    %64 = vector.shape_cast %63 : vector<1x1x8x4xbf16> to vector<8x4xbf16>
    %cst_80 = arith.constant dense<0.000000e+00> : vector<8x384xf32>
    %65 = tpu.matmul %64, %62, %cst_80 {dimension_numbers = #tpu.dot_dimension_numbers<[1], [0], [0], [1], [0, 0, 1, 1], [], []>} : vector<8x4xbf16>, vector<4x384xbf16>, vector<8x384xf32> -> vector<8x384xf32>
    %c0_81 = arith.constant 0 : index
    %c0_82 = arith.constant 0 : index
    %66 = vector.load %arg7[%c0_81, %c0_82] : memref<8x384xf32, #tpu.memory_space<vmem>>, vector<8x384xf32>
    %67 = arith.addf %66, %65 : vector<8x384xf32>
    %c0_83 = arith.constant 0 : index
    %c0_84 = arith.constant 0 : index
    %68 = vector.load %arg7[%c0_83, %c0_84] : memref<8x384xf32, #tpu.memory_space<vmem>>, vector<8x384xf32>
    tpu.vector_store %arg7[%c0_83, %c0_84], %67 {strides = array<i32>} : memref<8x384xf32, #tpu.memory_space<vmem>>, vector<8x384xf32>,
    %c0_85 = arith.constant 0 : index
    %c0_86 = arith.constant 0 : index
    %c0_87 = arith.constant 0 : index
    %69 = vector.load %arg3[%c0_85, %c0_86, %c0_87] : memref<1x4x512xbf16, #tpu.memory_space<vmem>>, vector<1x4x512xbf16>
    %70 = vector.shape_cast %69 : vector<1x4x512xbf16> to vector<4x512xbf16>
    %71 = vector.extract_strided_slice %70 {offsets = [0, 38], sizes = [4, 384], strides = [1, 1]} : vector<4x512xbf16> to vector<4x384xbf16>
    %c0_88 = arith.constant 0 : index
    %c8 = arith.constant 8 : index
    %c0_89 = arith.constant 0 : index
    %c0_90 = arith.constant 0 : index
    %72 = vector.load %arg2[%c0_88, %c8, %c0_89, %c0_90] : memref<1x9x8x4xbf16, #tpu.memory_space<vmem>>, vector<1x1x8x4xbf16>
    %73 = vector.shape_cast %72 : vector<1x1x8x4xbf16> to vector<8x4xbf16>
    %cst_91 = arith.constant dense<0.000000e+00> : vector<8x384xf32>
    %74 = tpu.matmul %73, %71, %cst_91 {dimension_numbers = #tpu.dot_dimension_numbers<[1], [0], [0], [1], [0, 0, 1, 1], [], []>} : vector<8x4xbf16>, vector<4x384xbf16>, vector<8x384xf32> -> vector<8x384xf32>
    %c0_92 = arith.constant 0 : index
    %c0_93 = arith.constant 0 : index
    %75 = vector.load %arg7[%c0_92, %c0_93] : memref<8x384xf32, #tpu.memory_space<vmem>>, vector<8x384xf32>
    %76 = arith.addf %75, %74 : vector<8x384xf32>
    %c0_94 = arith.constant 0 : index
    %c0_95 = arith.constant 0 : index
    %77 = vector.load %arg7[%c0_94, %c0_95] : memref<8x384xf32, #tpu.memory_space<vmem>>, vector<8x384xf32>
    tpu.vector_store %arg7[%c0_94, %c0_95], %76 {strides = array<i32>} : memref<8x384xf32, #tpu.memory_space<vmem>>, vector<8x384xf32>,
    %c0_96 = arith.constant 0 : index
    %c0_97 = arith.constant 0 : index
    %78 = vector.load %arg7[%c0_96, %c0_97] : memref<8x384xf32, #tpu.memory_space<vmem>>, vector<8x384xf32>
    %c0_98 = arith.constant 0 : index
    %c0_99 = arith.constant 0 : index
    %79 = vector.load %arg4[%c0_98, %c0_99] : memref<8x1xf32, #tpu.memory_space<vmem>>, vector<8x1xf32>
    %80 = vector.broadcast %79 : vector<8x1xf32> to vector<8x384xf32>
    %81 = arith.mulf %78, %80 : vector<8x384xf32>
    %c0_100 = arith.constant 0 : index
    %c0_101 = arith.constant 0 : index
    %82 = vector.load %arg5[%c0_100, %c0_101] : memref<8x1xf32, #tpu.memory_space<vmem>>, vector<8x1xf32>
    %83 = vector.broadcast %82 : vector<8x1xf32> to vector<8x384xf32>
    %84 = arith.addf %81, %83 : vector<8x384xf32>
    %cst_102 = arith.constant 0.000000e+00 : f32
    %85 = vector.broadcast %cst_102 : f32 to vector<8x384xf32>
    %86 = arith.maximumf %84, %85 : vector<8x384xf32>
    %87 = arith.truncf %86 : vector<8x384xf32> to vector<8x384xbf16>
    %c0_103 = arith.constant 0 : index
    %c0_104 = arith.constant 0 : index
    %c0_105 = arith.constant 0 : index
    %88 = vector.load %arg6[%c0_103, %c0_104, %c0_105] : memref<1x8x384xbf16, #tpu.memory_space<vmem>>, vector<1x8x384xbf16>
    %89 = vector.shape_cast %88 : vector<1x8x384xbf16> to vector<8x384xbf16>
    %90 = vector.shape_cast %87 : vector<8x384xbf16> to vector<1x8x384xbf16>
    tpu.vector_store %arg6[%c0_103, %c0_104, %c0_105], %90 {strides = array<i32>} : memref<1x8x384xbf16, #tpu.memory_space<vmem>>, vector<1x8x384xbf16>,
    return
  }
  func.func @transform_0(%arg0: i32, %arg1: i32) -> (i32, i32, i32, i32) {
    %c0_i32 = arith.constant 0 : i32
    %c0_i32_0 = arith.constant 0 : i32
    %c0_i32_1 = arith.constant 0 : i32
    %c0_i32_2 = arith.constant 0 : i32
    return %arg0, %c0_i32, %c0_i32_0, %c0_i32_1 : i32, i32, i32, i32
  }
  func.func @transform_1(%arg0: i32, %arg1: i32) -> (i32, i32, i32) {
    %c0_i32 = arith.constant 0 : i32
    %c0_i32_0 = arith.constant 0 : i32
    %c0_i32_1 = arith.constant 0 : i32
    return %arg0, %c0_i32, %c0_i32_0 : i32, i32, i32
  }
  func.func @transform_2(%arg0: i32, %arg1: i32) -> (i32, i32) {
    %c0_i32 = arith.constant 0 : i32
    %c0_i32_0 = arith.constant 0 : i32
    %c0_i32_1 = arith.constant 0 : i32
    return %c0_i32, %c0_i32_0 : i32, i32
  }
  func.func @transform_3(%arg0: i32, %arg1: i32) -> (i32, i32) {
    %c0_i32 = arith.constant 0 : i32
    %c0_i32_0 = arith.constant 0 : i32
    %c0_i32_1 = arith.constant 0 : i32
    return %c0_i32, %c0_i32_0 : i32, i32
  }
  func.func @transform_4(%arg0: i32, %arg1: i32) -> (i32, i32, i32) {
    %c0_i32 = arith.constant 0 : i32
    %c0_i32_0 = arith.constant 0 : i32
    return %arg0, %c0_i32, %arg1 : i32, i32, i32
  }
}

</mosaic_0001>

<llo_original>
// kernel: tpu_custom_call.1
$region0: #{tpu_custom_call.1}
  #allocation0 [shape = 'u32[]', space=smem, size = 0x4, offset = 0x4, fixed_abs, tag = 'smem constant byte address 0x4 - core index']
  #allocation1 [shape = 'u32[72,128]{1,0:T(1,128)}', space=vmem, size = 0x9000, scoped, tag = 'internal scratch']
  #allocation2 [shape = 'f32[8,384]{1,0:T(8,128)}', space=vmem, size = 0x3000, scoped, tag = 'scratch operand']
  %s0 = inlined_call_operand.vmem [shape: bf16[2,9,8,4], index: 0, kind: input, shape index: {}]
  %s1 = inlined_call_operand.vmem [shape: bf16[2,4,512], index: 1, kind: input, shape index: {}]
  %s2 = inlined_call_operand.vmem [shape: f32[8,1], index: 2, kind: input, shape index: {}]
  %s3 = inlined_call_operand.vmem [shape: f32[8,1], index: 3, kind: input, shape index: {}]
  %s4 = inlined_call_operand.hbm [shape: bf16[2,8,384], index: 4, kind: output, shape index: {}]
  %s5 = sld [smem:[#allocation0]]
  $region49: #{tpu_custom_call.1} parent=0
    _
  %s7 = ssub.s32 1, %s5
  %s8 = scalar_select 0, %s7, %s5
  $region1: #{tpu_custom_call.1} parent=0
    #allocation3 [shape = 'u8[12288]{0}', space=vmem, size = 0x3000, scoped, tag = 'output window, operand 0']
    #allocation4 [shape = 's32[2]{0}', space=sflag, size = 0x8, scoped, tag = 'scoped memory for tpu_custom_call.1']
    %9 = vsyncpa [#allocation4], 0
    %s10 = scalar_lea.sflag [#allocation4], 1
    %11 = vsyncpa %s10, 0
    loop: start=0, step=1, limit=4
    $region2: #{tpu_custom_call.1} parent=1 // loop_pre_header
      _
    $region3: #{tpu_custom_call.1} parent=1 // loop_header
      %s13 = sphi 0, %s17
      %p14 = scmp.ge.s32.totalorder %s13, 4
      %s20 = sphi 0, %s32
      %s21 = sphi 0, %s28
      %s22 = sphi 0, %s20
      %s23 = sphi 0, %s21
      %s24 = sphi 0, %s22
      %s25 = sphi 0, %s23
      %s35 = sphi 0, %s37
      %s38 = sphi 0, %s35
      %s39 = sphi 0, %s38
      %s55 = sphi 0, %s39
      %s61 = sphi 0, %s63
      %s64 = sphi 0, %s61
      %s65 = sphi 0, %s64
      %s81 = sphi 0, %s65
      %s85 = sphi 0, %s85
      %s87 = sphi 0, %s85
      %s88 = sphi 0, %s87
      %s102 = sphi 0, %s88
      %s106 = sphi 0, %s106
      %s108 = sphi 0, %s106
      %s109 = sphi 0, %s108
      %s123 = sphi 0, %s109
      %s131 = sphi 0, %s133
      %s134 = sphi 0, %s131
      %s135 = sphi 0, %s134
      %s151 = sphi 0, %s135
    $region4: #{tpu_custom_call.1} parent=1 // loop_header_branch
      %16 = sbr.rel (%p14) target = $region8
    $region5: #{tpu_custom_call.1} parent=1 // loop_body
      %s18 = ssub.s32 %s13, 1
      %s19 = ssub.s32 %s13, 2
      %s26 = sadd.s32 1, %s21
      %p27 = scmp.ge.s32.totalorder %s26, 1
      %s28 = scalar_select %p27, 0, %s26
      %s29 = sadd.s32 1, %s20
      %s30 = scalar_select %p27, %s29, %s20
      %p31 = scmp.ge.s32.totalorder %s30, 2
      %s32 = scalar_select %p31, 0, %s30
      %s33 = ssub.s32 %s20, %s32
      %p34 = scmp.eq.s32.totalorder %s33, 0
      %s36 = sadd.s32 %s35, 1
      %s37 = scalar_select %p34, %s35, %s36
      %p40 = pneg %p34
      %p41 = scmp.eq.s32.totalorder %s13, 1
      %p42 = por %p40, %p41
      %p43 = scmp.ne.s32.totalorder %s35, %s38
      %p44 = scmp.eq.s32.totalorder %s13, 0
      %p45 = por %p43, %p44
      %p46 = scmp.ne.s32.totalorder %s35, %s38
      %p47 = scmp.eq.s32.totalorder %s18, 1
      %p48 = por %p46, %p47
      %p49 = scmp.ne.s32.totalorder %s38, %s39
      %p50 = scmp.eq.s32.totalorder %s18, 0
      %p51 = por %p49, %p50
      %p52 = scmp.ne.s32.totalorder %s38, %s39
      %p53 = scmp.eq.s32.totalorder %s19, 1
      %p54 = por %p52, %p53
      %p56 = scmp.ne.s32.totalorder %s39, %s55
      %p57 = scmp.eq.s32.totalorder %s19, 0
      %p58 = por %p56, %p57
      %s59 = ssub.s32 %s20, %s32
      %p60 = scmp.eq.s32.totalorder %s59, 0
      %s62 = sadd.s32 %s61, 1
      %s63 = scalar_select %p60, %s61, %s62
      %p66 = pneg %p60
      %p67 = scmp.eq.s32.totalorder %s13, 1
      %p68 = por %p66, %p67
      %p69 = scmp.ne.s32.totalorder %s61, %s64
      %p70 = scmp.eq.s32.totalorder %s13, 0
      %p71 = por %p69, %p70
      %p72 = scmp.ne.s32.totalorder %s61, %s64
      %p73 = scmp.eq.s32.totalorder %s18, 1
      %p74 = por %p72, %p73
      %p75 = scmp.ne.s32.totalorder %s64, %s65
      %p76 = scmp.eq.s32.totalorder %s18, 0
      %p77 = por %p75, %p76
      %p78 = scmp.ne.s32.totalorder %s64, %s65
      %p79 = scmp.eq.s32.totalorder %s19, 1
      %p80 = por %p78, %p79
      %p82 = scmp.ne.s32.totalorder %s65, %s81
      %p83 = scmp.eq.s32.totalorder %s19, 0
      %p84 = por %p82, %p83
      %s86 = sadd.s32 %s85, 1
      %p89 = scmp.eq.s32.totalorder %s13, 1
      %p90 = scmp.ne.s32.totalorder %s85, %s87
      %p91 = scmp.eq.s32.totalorder %s13, 0
      %p92 = por %p90, %p91
      %p93 = scmp.ne.s32.totalorder %s85, %s87
      %p94 = scmp.eq.s32.totalorder %s18, 1
      %p95 = por %p93, %p94
      %p96 = scmp.ne.s32.totalorder %s87, %s88
      %p97 = scmp.eq.s32.totalorder %s18, 0
      %p98 = por %p96, %p97
      %p99 = scmp.ne.s32.totalorder %s87, %s88
      %p100 = scmp.eq.s32.totalorder %s19, 1
      %p101 = por %p99, %p100
      %p103 = scmp.ne.s32.totalorder %s88, %s102
      %p104 = scmp.eq.s32.totalorder %s19, 0
      %p105 = por %p103, %p104
      %s107 = sadd.s32 %s106, 1
      %p110 = scmp.eq.s32.totalorder %s13, 1
      %p111 = scmp.ne.s32.totalorder %s106, %s108
      %p112 = scmp.eq.s32.totalorder %s13, 0
      %p113 = por %p111, %p112
      %p114 = scmp.ne.s32.totalorder %s106, %s108
      %p115 = scmp.eq.s32.totalorder %s18, 1
      %p116 = por %p114, %p115
      %p117 = scmp.ne.s32.totalorder %s108, %s109
      %p118 = scmp.eq.s32.totalorder %s18, 0
      %p119 = por %p117, %p118
      %p120 = scmp.ne.s32.totalorder %s108, %s109
      %p121 = scmp.eq.s32.totalorder %s19, 1
      %p122 = por %p120, %p121
      %p124 = scmp.ne.s32.totalorder %s109, %s123
      %p125 = scmp.eq.s32.totalorder %s19, 0
      %p126 = por %p124, %p125
      %s127 = ssub.s32 %s20, %s32
      %s128 = ssub.s32 %s21, %s28
      %s129 = sor.u32 %s127, %s128
      %p130 = scmp.eq.s32.totalorder %s129, 0
      %s132 = sadd.s32 %s131, 1
      %s133 = scalar_select %p130, %s131, %s132
      %p136 = pneg %p130
      %p137 = scmp.eq.s32.totalorder %s13, 1
      %p138 = por %p136, %p137
      %p139 = scmp.ne.s32.totalorder %s131, %s134
      %p140 = scmp.eq.s32.totalorder %s13, 0
      %p141 = por %p139, %p140
      %p142 = scmp.ne.s32.totalorder %s131, %s134
      %p143 = scmp.eq.s32.totalorder %s18, 1
      %p144 = por %p142, %p143
      %p145 = scmp.ne.s32.totalorder %s134, %s135
      %p146 = scmp.eq.s32.totalorder %s18, 0
      %p147 = por %p145, %p146
      %p148 = scmp.ne.s32.totalorder %s134, %s135
      %p149 = scmp.eq.s32.totalorder %s19, 1
      %p150 = por %p148, %p149
      %p152 = scmp.ne.s32.totalorder %s135, %s151
      %p153 = scmp.eq.s32.totalorder %s19, 0
      %p154 = por %p152, %p153
      %p155 = scmp.le.s32.totalorder 1, %s13
      %p156 = scmp.lt.s32.totalorder %s13, 3
      %p157 = pnand %p155, %p156
      %p158 = pneg %p157
      // Predicated region
      $region9: #{tpu_custom_call.1} parent=5 // pred_check
        _
      $region10: #{tpu_custom_call.1} parent=5 // pred_check_branch
        %160 = sbr.rel (%p157) target = $region12
      $region11: #{tpu_custom_call.1} parent=5 // pred_region
        %s161 = ssub.s32 %s13, 1
        // Predicated region
        $region13: #{tpu_custom_call.1} parent=11 // pred_check
          %p162 = pneg %p98
        $region14: #{tpu_custom_call.1} parent=11 // pred_check_branch
          %164 = sbr.rel (%p162) target = $region16
        $region15: #{tpu_custom_call.1} parent=11 // pred_region
          _
        $region16: #{tpu_custom_call.1} parent=11 // pred_fallthru
          _
        // Predicated region
        $region17: #{tpu_custom_call.1} parent=11 // pred_check
          %p165 = pneg %p119
        $region18: #{tpu_custom_call.1} parent=11 // pred_check_branch
          %167 = sbr.rel (%p165) target = $region20
        $region19: #{tpu_custom_call.1} parent=11 // pred_region
          _
        $region20: #{tpu_custom_call.1} parent=11 // pred_fallthru
          _
      $region12: #{tpu_custom_call.1} parent=5 // pred_fallthru
        _
      %p168 = scmp.lt.s32.totalorder %s13, 2
      // Predicated region
      $region21: #{tpu_custom_call.1} parent=5 // pred_check
        %p169 = pneg %p168
      $region22: #{tpu_custom_call.1} parent=5 // pred_check_branch
        %171 = sbr.rel (%p169) target = $region24
      $region23: #{tpu_custom_call.1} parent=5 // pred_region
        // Predicated region
        $region25: #{tpu_custom_call.1} parent=23 // pred_check
          %p172 = pneg %p45
        $region26: #{tpu_custom_call.1} parent=23 // pred_check_branch
          %174 = sbr.rel (%p172) target = $region28
        $region27: #{tpu_custom_call.1} parent=23 // pred_region
          %p175 = scmp.lt.s32.totalorder %s20, 1
          %s176 = scalar_select %p175, %s20, 1
          %s177 = smul.addr %s176, 9
          %s178 = smul.addr %s177, 4
          %s179 = scalar_lea.vmem %s0, %s178
        $region28: #{tpu_custom_call.1} parent=23 // pred_fallthru
          _
        // Predicated region
        $region29: #{tpu_custom_call.1} parent=23 // pred_check
          %p180 = pneg %p71
        $region30: #{tpu_custom_call.1} parent=23 // pred_check_branch
          %182 = sbr.rel (%p180) target = $region32
        $region31: #{tpu_custom_call.1} parent=23 // pred_region
          %p183 = scmp.lt.s32.totalorder %s20, 1
          %s184 = scalar_select %p183, %s20, 1
          %s185 = smul.addr %s184, 4
          %s186 = smul.addr %s185, 2
          %s187 = scalar_lea.vmem %s1, %s186
        $region32: #{tpu_custom_call.1} parent=23 // pred_fallthru
          _
      $region24: #{tpu_custom_call.1} parent=5 // pred_fallthru
        _
      %p188 = scmp.le.s32.totalorder 1, %s13
      %p189 = scmp.lt.s32.totalorder %s13, 3
      %p190 = pnand %p188, %p189
      %p191 = pneg %p190
      // Predicated region
      $region33: #{tpu_custom_call.1} parent=5 // pred_check
        _
      $region34: #{tpu_custom_call.1} parent=5 // pred_check_branch
        %193 = sbr.rel (%p190) target = $region36
      $region35: #{tpu_custom_call.1} parent=5 // pred_region
        %s194 = ssub.s32 %s13, 1
        %p195 = scmp.lt.s32.totalorder %s22, 1
        %s196 = scalar_select %p195, %s22, 1
        %s197 = smul.addr %s196, 9
        %s198 = smul.addr %s197, 4
        %s199 = scalar_lea.vmem %s0, %s198
        %p200 = pneg %p51
        %p201 = pneg %p48
        %p202 = scmp.lt.s32.totalorder %s22, 1
        %s203 = scalar_select %p202, %s22, 1
        %s204 = smul.addr %s203, 4
        %s205 = smul.addr %s204, 2
        %s206 = scalar_lea.vmem %s1, %s205
        %p207 = pneg %p77
        %p208 = pneg %p74
        %p209 = pneg %p98
        %p210 = pneg %p95
        %p211 = pneg %p119
        %p212 = pneg %p116
        %p213 = pneg %p147
        %p214 = pneg %p144
        %s215 = sand.u32 %s134, 1
        %s216 = scalar_lea.sflag [#allocation4], %s215
        %s217 = sand.u32 %s134, 1
        %s218 = smul.addr %s217, 12
        %s219 = scalar_lea.vmem [#allocation3], %s218
        %p220 = scmp.lt.s32.totalorder %s22, 1
        %s221 = scalar_select %p220, %s22, 1
        %s222 = smul.addr %s221, 9
        %s223 = smul.addr %s222, 4
        %s224 = scalar_lea.vmem %s0, %s223
        %p225 = scmp.lt.s32.totalorder %s22, 1
        %s226 = scalar_select %p225, %s22, 1
        %s227 = smul.addr %s226, 4
        %s228 = smul.addr %s227, 2
        %s229 = scalar_lea.vmem %s1, %s228
        %s230 = smul.u32 3, %s23
        %v232 = vld [vmem:[%s229] sm:$0x3f]
        %v233 = vld [vmem:[%s224] sm:$0xf]
        %235 = vst [vmem:[#allocation1] ss:$4 sm:$0xff] %v232
        %v236 = vld.sshfl [vmem:[#allocation1] sm:$0xff pattern:$0x73625140]
        %v237 = vld.sshfl [vmem:[#allocation1 + $0x8] sm:$0xff pattern:$0x73625140]
        %v238 = vld.sshfl [vmem:[#allocation1 + $0x10] sm:$0xff pattern:$0x73625140]
        %vm239 = vcmask 31744
        %v241 = vsel %vm239, %v233, 0
        %vm243 = vcmask 1041408
        %v244 = vsel %vm243, %v236, 0
        %v246 = vsel %vm243, %v237, 0
        %v248 = vsel %vm243, %v238, 0
        %250 = vmatpush.bf16.msra.mxu0 0
        %251 = vmatpush.bf16.msra.mxu0 0
        %252 = vmatpush.bf16.msra.mxu0 0
        %253 = vmatpush.bf16.msra.mxu0 0
        %254 = vmatpush.bf16.msra.mxu0 0
        %255 = vmatpush.bf16.msra.mxu0 0
        %256 = vmatpush.bf16.msra.mxu0 0
        %257 = vmatpush.bf16.msra.mxu0 %v244
        %258 = vmatmul.bf16.gmra.mxu0 %v241
        %v259 = vpop.f32.mrf.mxu0
        %v260 = vadd.f32 0.0, %v259
        %v261 = vpop.f32.mrf.mxu0
        %262 = vdwg.mxu0
        %263 = vmatpush.bf16.msra.mxu0 0
        %264 = vmatpush.bf16.msra.mxu0 0
        %265 = vmatpush.bf16.msra.mxu0 0
        %266 = vmatpush.bf16.msra.mxu0 0
        %267 = vmatpush.bf16.msra.mxu0 0
        %268 = vmatpush.bf16.msra.mxu0 0
        %269 = vmatpush.bf16.msra.mxu0 0
        %270 = vmatpush.bf16.msra.mxu0 %v246
        %271 = vmatmul.bf16.gmra.mxu0 %v241
        %v272 = vpop.f32.mrf.mxu0
        %v273 = vadd.f32 0.0, %v272
        %v274 = vpop.f32.mrf.mxu0
        %275 = vdwg.mxu0
        %276 = vmatpush.bf16.msra.mxu0 0
        %277 = vmatpush.bf16.msra.mxu0 0
        %278 = vmatpush.bf16.msra.mxu0 0
        %279 = vmatpush.bf16.msra.mxu0 0
        %280 = vmatpush.bf16.msra.mxu0 0
        %281 = vmatpush.bf16.msra.mxu0 0
        %282 = vmatpush.bf16.msra.mxu0 0
        %283 = vmatpush.bf16.msra.mxu0 %v248
        %284 = vmatmul.bf16.gmra.mxu0 %v241
        %v285 = vpop.f32.mrf.mxu0
        %v286 = vadd.f32 0.0, %v285
        %v287 = vpop.f32.mrf.mxu0
        %288 = vdwg.mxu0
        %289 = vst [vmem:[#allocation2] sm:$0xff] %v260
        %290 = vst [vmem:[#allocation2 + $0x8] sm:$0xff] %v273
        %291 = vst [vmem:[#allocation2 + $0x10] sm:$0xff] %v286
        %v292 = vld [vmem:[%s229] sm:$0xff]
        %s293 = scalar_lea.vmem %s224, 4
        %v294 = vld [vmem:[%s293] sm:$0xf]
        %296 = vst [vmem:[#allocation1] ss:$4 sm:$0xff] %v292
        %v297 = vld.sshfl [vmem:[#allocation1] sm:$0xff pattern:$0x73625140]
        %v299 = vld.sshfl [vmem:[#allocation1 + $0x8] sm:$0xff pattern:$0x73625140]
        %v301 = vld.sshfl [vmem:[#allocation1 + $0x10] sm:$0xff pattern:$0x73625140]
        %v303 = vld.sshfl [vmem:[#allocation1 + $0x18] sm:$0xff pattern:$0x73625140]
        %305 = vrot.lane.b32.xlu0 %v297, 127
        %v306 = vpop.permute.xlu0 %305
        %307 = vrot.lane.b32.xlu0 %v299, 127
        %v308 = vpop.permute.xlu0 %307
        %309 = vrot.lane.b32.xlu0 %v301, 127
        %v310 = vpop.permute.xlu0 %309
        %311 = vrot.lane.b32.xlu0 %v303, 127
        %v312 = vpop.permute.xlu0 %311
        %vm313 = vcmask 1039360
        %v314 = vsel %vm313, %v306, %v308
        %v315 = vsel %vm313, %v308, %v310
        %v316 = vsel %vm313, %v310, %v312
        %v318 = vsel %vm239, %v294, 0
        %v321 = vsel %vm243, %v314, 0
        %v324 = vsel %vm243, %v315, 0
        %v327 = vsel %vm243, %v316, 0
        %329 = vmatpush.bf16.msra.mxu0 0
        %330 = vmatpush.bf16.msra.mxu0 0
        %331 = vmatpush.bf16.msra.mxu0 0
        %332 = vmatpush.bf16.msra.mxu0 0
        %333 = vmatpush.bf16.msra.mxu0 0
        %334 = vmatpush.bf16.msra.mxu0 0
        %335 = vmatpush.bf16.msra.mxu0 0
        %336 = vmatpush.bf16.msra.mxu0 %v321
        %337 = vmatmul.bf16.gmra.mxu0 %v318
        %v338 = vpop.f32.mrf.mxu0
        %v339 = vadd.f32 0.0, %v338
        %v340 = vpop.f32.mrf.mxu0
        %341 = vdwg.mxu0
        %342 = vmatpush.bf16.msra.mxu0 0
        %343 = vmatpush.bf16.msra.mxu0 0
        %344 = vmatpush.bf16.msra.mxu0 0
        %345 = vmatpush.bf16.msra.mxu0 0
        %346 = vmatpush.bf16.msra.mxu0 0
        %347 = vmatpush.bf16.msra.mxu0 0
        %348 = vmatpush.bf16.msra.mxu0 0
        %349 = vmatpush.bf16.msra.mxu0 %v324
        %350 = vmatmul.bf16.gmra.mxu0 %v318
        %v351 = vpop.f32.mrf.mxu0
        %v352 = vadd.f32 0.0, %v351
        %v353 = vpop.f32.mrf.mxu0
        %354 = vdwg.mxu0
        %355 = vmatpush.bf16.msra.mxu0 0
        %356 = vmatpush.bf16.msra.mxu0 0
        %357 = vmatpush.bf16.msra.mxu0 0
        %358 = vmatpush.bf16.msra.mxu0 0
        %359 = vmatpush.bf16.msra.mxu0 0
        %360 = vmatpush.bf16.msra.mxu0 0
        %361 = vmatpush.bf16.msra.mxu0 0
        %362 = vmatpush.bf16.msra.mxu0 %v327
        %363 = vmatmul.bf16.gmra.mxu0 %v318
        %v364 = vpop.f32.mrf.mxu0
        %v365 = vadd.f32 0.0, %v364
        %v366 = vpop.f32.mrf.mxu0
        %367 = vdwg.mxu0
        %v368 = vld [vmem:[#allocation2] sm:$0xff]
        %v369 = vld [vmem:[#allocation2 + $0x8] sm:$0xff]
        %v370 = vld [vmem:[#allocation2 + $0x10] sm:$0xff]
        %v371 = vadd.f32 %v368, %v339
        %v372 = vadd.f32 %v369, %v352
        %v373 = vadd.f32 %v370, %v365
        %374 = vst [vmem:[#allocation2] sm:$0xff] %v371
        %375 = vst [vmem:[#allocation2 + $0x8] sm:$0xff] %v372
        %376 = vst [vmem:[#allocation2 + $0x10] sm:$0xff] %v373
        %v377 = vld [vmem:[%s229] sm:$0xff]
        %s378 = scalar_lea.vmem %s224, 8
        %v379 = vld [vmem:[%s378] sm:$0xf]
        %381 = vst [vmem:[#allocation1] ss:$4 sm:$0xff] %v377
        %v382 = vld.sshfl [vmem:[#allocation1] sm:$0xff pattern:$0x73625140]
        %v384 = vld.sshfl [vmem:[#allocation1 + $0x8] sm:$0xff pattern:$0x73625140]
        %v386 = vld.sshfl [vmem:[#allocation1 + $0x10] sm:$0xff pattern:$0x73625140]
        %v388 = vld.sshfl [vmem:[#allocation1 + $0x18] sm:$0xff pattern:$0x73625140]
        %390 = vrot.lane.b32.xlu0 %v382, 126
        %v391 = vpop.permute.xlu0 %390
        %392 = vrot.lane.b32.xlu0 %v384, 126
        %v393 = vpop.permute.xlu0 %392
        %394 = vrot.lane.b32.xlu0 %v386, 126
        %v395 = vpop.permute.xlu0 %394
        %396 = vrot.lane.b32.xlu0 %v388, 126
        %v397 = vpop.permute.xlu0 %396
        %vm398 = vcmask 1031168
        %v399 = vsel %vm398, %v391, %v393
        %v400 = vsel %vm398, %v393, %v395
        %v401 = vsel %vm398, %v395, %v397
        %v403 = vsel %vm239, %v379, 0
        %v406 = vsel %vm243, %v399, 0
        %v409 = vsel %vm243, %v400, 0
        %v412 = vsel %vm243, %v401, 0
        %414 = vmatpush.bf16.msra.mxu0 0
        %415 = vmatpush.bf16.msra.mxu0 0
        %416 = vmatpush.bf16.msra.mxu0 0
        %417 = vmatpush.bf16.msra.mxu0 0
        %418 = vmatpush.bf16.msra.mxu0 0
        %419 = vmatpush.bf16.msra.mxu0 0
        %420 = vmatpush.bf16.msra.mxu0 0
        %421 = vmatpush.bf16.msra.mxu0 %v406
        %422 = vmatmul.bf16.gmra.mxu0 %v403
        %v423 = vpop.f32.mrf.mxu0
        %v424 = vadd.f32 0.0, %v423
        %v425 = vpop.f32.mrf.mxu0
        %426 = vdwg.mxu0
        %427 = vmatpush.bf16.msra.mxu0 0
        %428 = vmatpush.bf16.msra.mxu0 0
        %429 = vmatpush.bf16.msra.mxu0 0
        %430 = vmatpush.bf16.msra.mxu0 0
        %431 = vmatpush.bf16.msra.mxu0 0
        %432 = vmatpush.bf16.msra.mxu0 0
        %433 = vmatpush.bf16.msra.mxu0 0
        %434 = vmatpush.bf16.msra.mxu0 %v409
        %435 = vmatmul.bf16.gmra.mxu0 %v403
        %v436 = vpop.f32.mrf.mxu0
        %v437 = vadd.f32 0.0, %v436
        %v438 = vpop.f32.mrf.mxu0
        %439 = vdwg.mxu0
        %440 = vmatpush.bf16.msra.mxu0 0
        %441 = vmatpush.bf16.msra.mxu0 0
        %442 = vmatpush.bf16.msra.mxu0 0
        %443 = vmatpush.bf16.msra.mxu0 0
        %444 = vmatpush.bf16.msra.mxu0 0
        %445 = vmatpush.bf16.msra.mxu0 0
        %446 = vmatpush.bf16.msra.mxu0 0
        %447 = vmatpush.bf16.msra.mxu0 %v412
        %448 = vmatmul.bf16.gmra.mxu0 %v403
        %v449 = vpop.f32.mrf.mxu0
        %v450 = vadd.f32 0.0, %v449
        %v451 = vpop.f32.mrf.mxu0
        %452 = vdwg.mxu0
        %v453 = vld [vmem:[#allocation2] sm:$0xff]
        %v454 = vld [vmem:[#allocation2 + $0x8] sm:$0xff]
        %v455 = vld [vmem:[#allocation2 + $0x10] sm:$0xff]
        %v456 = vadd.f32 %v453, %v424
        %v457 = vadd.f32 %v454, %v437
        %v458 = vadd.f32 %v455, %v450
        %459 = vst [vmem:[#allocation2] sm:$0xff] %v456
        %460 = vst [vmem:[#allocation2 + $0x8] sm:$0xff] %v457
        %461 = vst [vmem:[#allocation2 + $0x10] sm:$0xff] %v458
        %v462 = vld [vmem:[%s229] sm:$0xff]
        %s463 = scalar_lea.vmem %s224, 12
        %v464 = vld [vmem:[%s463] sm:$0xf]
        %466 = vst [vmem:[#allocation1] ss:$4 sm:$0xff] %v462
        %v467 = vld.sshfl [vmem:[#allocation1] sm:$0xff pattern:$0x73625140]
        %v469 = vld.sshfl [vmem:[#allocation1 + $0x8] sm:$0xff pattern:$0x73625140]
        %v471 = vld.sshfl [vmem:[#allocation1 + $0x10] sm:$0xff pattern:$0x73625140]
        %v473 = vld.sshfl [vmem:[#allocation1 + $0x18] sm:$0xff pattern:$0x73625140]
        %475 = vrot.lane.b32.xlu0 %v467, 110
        %v476 = vpop.permute.xlu0 %475
        %477 = vrot.lane.b32.xlu0 %v469, 110
        %v478 = vpop.permute.xlu0 %477
        %479 = vrot.lane.b32.xlu0 %v471, 110
        %v480 = vpop.permute.xlu0 %479
        %481 = vrot.lane.b32.xlu0 %v473, 110
        %v482 = vpop.permute.xlu0 %481
        %vm483 = vcmask 900096
        %v484 = vsel %vm483, %v476, %v478
        %v485 = vsel %vm483, %v478, %v480
        %v486 = vsel %vm483, %v480, %v482
        %v488 = vsel %vm239, %v464, 0
        %v491 = vsel %vm243, %v484, 0
        %v494 = vsel %vm243, %v485, 0
        %v497 = vsel %vm243, %v486, 0
        %499 = vmatpush.bf16.msra.mxu0 0
        %500 = vmatpush.bf16.msra.mxu0 0
        %501 = vmatpush.bf16.msra.mxu0 0
        %502 = vmatpush.bf16.msra.mxu0 0
        %503 = vmatpush.bf16.msra.mxu0 0
        %504 = vmatpush.bf16.msra.mxu0 0
        %505 = vmatpush.bf16.msra.mxu0 0
        %506 = vmatpush.bf16.msra.mxu0 %v491
        %507 = vmatmul.bf16.gmra.mxu0 %v488
        %v508 = vpop.f32.mrf.mxu0
        %v509 = vadd.f32 0.0, %v508
        %v510 = vpop.f32.mrf.mxu0
        %511 = vdwg.mxu0
        %512 = vmatpush.bf16.msra.mxu0 0
        %513 = vmatpush.bf16.msra.mxu0 0
        %514 = vmatpush.bf16.msra.mxu0 0
        %515 = vmatpush.bf16.msra.mxu0 0
        %516 = vmatpush.bf16.msra.mxu0 0
        %517 = vmatpush.bf16.msra.mxu0 0
        %518 = vmatpush.bf16.msra.mxu0 0
        %519 = vmatpush.bf16.msra.mxu0 %v494
        %520 = vmatmul.bf16.gmra.mxu0 %v488
        %v521 = vpop.f32.mrf.mxu0
        %v522 = vadd.f32 0.0, %v521
        %v523 = vpop.f32.mrf.mxu0
        %524 = vdwg.mxu0
        %525 = vmatpush.bf16.msra.mxu0 0
        %526 = vmatpush.bf16.msra.mxu0 0
        %527 = vmatpush.bf16.msra.mxu0 0
        %528 = vmatpush.bf16.msra.mxu0 0
        %529 = vmatpush.bf16.msra.mxu0 0
        %530 = vmatpush.bf16.msra.mxu0 0
        %531 = vmatpush.bf16.msra.mxu0 0
        %532 = vmatpush.bf16.msra.mxu0 %v497
        %533 = vmatmul.bf16.gmra.mxu0 %v488
        %v534 = vpop.f32.mrf.mxu0
        %v535 = vadd.f32 0.0, %v534
        %v536 = vpop.f32.mrf.mxu0
        %537 = vdwg.mxu0
        %v538 = vld [vmem:[#allocation2] sm:$0xff]
        %v539 = vld [vmem:[#allocation2 + $0x8] sm:$0xff]
        %v540 = vld [vmem:[#allocation2 + $0x10] sm:$0xff]
        %v541 = vadd.f32 %v538, %v509
        %v542 = vadd.f32 %v539, %v522
        %v543 = vadd.f32 %v540, %v535
        %544 = vst [vmem:[#allocation2] sm:$0xff] %v541
        %545 = vst [vmem:[#allocation2 + $0x8] sm:$0xff] %v542
        %546 = vst [vmem:[#allocation2 + $0x10] sm:$0xff] %v543
        %v547 = vld [vmem:[%s229] sm:$0xff]
        %s548 = scalar_lea.vmem %s224, 16
        %v549 = vld [vmem:[%s548] sm:$0xf]
        %551 = vst [vmem:[#allocation1] ss:$4 sm:$0xff] %v547
        %v552 = vld.sshfl [vmem:[#allocation1] sm:$0xff pattern:$0x73625140]
        %v554 = vld.sshfl [vmem:[#allocation1 + $0x8] sm:$0xff pattern:$0x73625140]
        %v556 = vld.sshfl [vmem:[#allocation1 + $0x10] sm:$0xff pattern:$0x73625140]
        %v558 = vld.sshfl [vmem:[#allocation1 + $0x18] sm:$0xff pattern:$0x73625140]
        %560 = vrot.lane.b32.xlu0 %v552, 109
        %v561 = vpop.permute.xlu0 %560
        %562 = vrot.lane.b32.xlu0 %v554, 109
        %v563 = vpop.permute.xlu0 %562
        %564 = vrot.lane.b32.xlu0 %v556, 109
        %v565 = vpop.permute.xlu0 %564
        %566 = vrot.lane.b32.xlu0 %v558, 109
        %v567 = vpop.permute.xlu0 %566
        %vm568 = vcmask 891904
        %v569 = vsel %vm568, %v561, %v563
        %v570 = vsel %vm568, %v563, %v565
        %v571 = vsel %vm568, %v565, %v567
        %v573 = vsel %vm239, %v549, 0
        %v576 = vsel %vm243, %v569, 0
        %v579 = vsel %vm243, %v570, 0
        %v582 = vsel %vm243, %v571, 0
        %584 = vmatpush.bf16.msra.mxu0 0
        %585 = vmatpush.bf16.msra.mxu0 0
        %586 = vmatpush.bf16.msra.mxu0 0
        %587 = vmatpush.bf16.msra.mxu0 0
        %588 = vmatpush.bf16.msra.mxu0 0
        %589 = vmatpush.bf16.msra.mxu0 0
        %590 = vmatpush.bf16.msra.mxu0 0
        %591 = vmatpush.bf16.msra.mxu0 %v576
        %592 = vmatmul.bf16.gmra.mxu0 %v573
        %v593 = vpop.f32.mrf.mxu0
        %v594 = vadd.f32 0.0, %v593
        %v595 = vpop.f32.mrf.mxu0
        %596 = vdwg.mxu0
        %597 = vmatpush.bf16.msra.mxu0 0
        %598 = vmatpush.bf16.msra.mxu0 0
        %599 = vmatpush.bf16.msra.mxu0 0
        %600 = vmatpush.bf16.msra.mxu0 0
        %601 = vmatpush.bf16.msra.mxu0 0
        %602 = vmatpush.bf16.msra.mxu0 0
        %603 = vmatpush.bf16.msra.mxu0 0
        %604 = vmatpush.bf16.msra.mxu0 %v579
        %605 = vmatmul.bf16.gmra.mxu0 %v573
        %v606 = vpop.f32.mrf.mxu0
        %v607 = vadd.f32 0.0, %v606
        %v608 = vpop.f32.mrf.mxu0
        %609 = vdwg.mxu0
        %610 = vmatpush.bf16.msra.mxu0 0
        %611 = vmatpush.bf16.msra.mxu0 0
        %612 = vmatpush.bf16.msra.mxu0 0
        %613 = vmatpush.bf16.msra.mxu0 0
        %614 = vmatpush.bf16.msra.mxu0 0
        %615 = vmatpush.bf16.msra.mxu0 0
        %616 = vmatpush.bf16.msra.mxu0 0
        %617 = vmatpush.bf16.msra.mxu0 %v582
        %618 = vmatmul.bf16.gmra.mxu0 %v573
        %v619 = vpop.f32.mrf.mxu0
        %v620 = vadd.f32 0.0, %v619
        %v621 = vpop.f32.mrf.mxu0
        %622 = vdwg.mxu0
        %v623 = vld [vmem:[#allocation2] sm:$0xff]
        %v624 = vld [vmem:[#allocation2 + $0x8] sm:$0xff]
        %v625 = vld [vmem:[#allocation2 + $0x10] sm:$0xff]
        %v626 = vadd.f32 %v623, %v594
        %v627 = vadd.f32 %v624, %v607
        %v628 = vadd.f32 %v625, %v620
        %629 = vst [vmem:[#allocation2] sm:$0xff] %v626
        %630 = vst [vmem:[#allocation2 + $0x8] sm:$0xff] %v627
        %631 = vst [vmem:[#allocation2 + $0x10] sm:$0xff] %v628
        %v632 = vld [vmem:[%s229] sm:$0xff]
        %s633 = scalar_lea.vmem %s224, 20
        %v634 = vld [vmem:[%s633] sm:$0xf]
        %636 = vst [vmem:[#allocation1] ss:$4 sm:$0xff] %v632
        %v637 = vld.sshfl [vmem:[#allocation1] sm:$0xff pattern:$0x73625140]
        %v639 = vld.sshfl [vmem:[#allocation1 + $0x8] sm:$0xff pattern:$0x73625140]
        %v641 = vld.sshfl [vmem:[#allocation1 + $0x10] sm:$0xff pattern:$0x73625140]
        %v643 = vld.sshfl [vmem:[#allocation1 + $0x18] sm:$0xff pattern:$0x73625140]
        %645 = vrot.lane.b32.xlu0 %v637, 108
        %v646 = vpop.permute.xlu0 %645
        %647 = vrot.lane.b32.xlu0 %v639, 108
        %v648 = vpop.permute.xlu0 %647
        %649 = vrot.lane.b32.xlu0 %v641, 108
        %v650 = vpop.permute.xlu0 %649
        %651 = vrot.lane.b32.xlu0 %v643, 108
        %v652 = vpop.permute.xlu0 %651
        %vm653 = vcmask 883712
        %v654 = vsel %vm653, %v646, %v648
        %v655 = vsel %vm653, %v648, %v650
        %v656 = vsel %vm653, %v650, %v652
        %v658 = vsel %vm239, %v634, 0
        %v661 = vsel %vm243, %v654, 0
        %v664 = vsel %vm243, %v655, 0
        %v667 = vsel %vm243, %v656, 0
        %669 = vmatpush.bf16.msra.mxu0 0
        %670 = vmatpush.bf16.msra.mxu0 0
        %671 = vmatpush.bf16.msra.mxu0 0
        %672 = vmatpush.bf16.msra.mxu0 0
        %673 = vmatpush.bf16.msra.mxu0 0
        %674 = vmatpush.bf16.msra.mxu0 0
        %675 = vmatpush.bf16.msra.mxu0 0
        %676 = vmatpush.bf16.msra.mxu0 %v661
        %677 = vmatmul.bf16.gmra.mxu0 %v658
        %v678 = vpop.f32.mrf.mxu0
        %v679 = vadd.f32 0.0, %v678
        %v680 = vpop.f32.mrf.mxu0
        %681 = vdwg.mxu0
        %682 = vmatpush.bf16.msra.mxu0 0
        %683 = vmatpush.bf16.msra.mxu0 0
        %684 = vmatpush.bf16.msra.mxu0 0
        %685 = vmatpush.bf16.msra.mxu0 0
        %686 = vmatpush.bf16.msra.mxu0 0
        %687 = vmatpush.bf16.msra.mxu0 0
        %688 = vmatpush.bf16.msra.mxu0 0
        %689 = vmatpush.bf16.msra.mxu0 %v664
        %690 = vmatmul.bf16.gmra.mxu0 %v658
        %v691 = vpop.f32.mrf.mxu0
        %v692 = vadd.f32 0.0, %v691
        %v693 = vpop.f32.mrf.mxu0
        %694 = vdwg.mxu0
        %695 = vmatpush.bf16.msra.mxu0 0
        %696 = vmatpush.bf16.msra.mxu0 0
        %697 = vmatpush.bf16.msra.mxu0 0
        %698 = vmatpush.bf16.msra.mxu0 0
        %699 = vmatpush.bf16.msra.mxu0 0
        %700 = vmatpush.bf16.msra.mxu0 0
        %701 = vmatpush.bf16.msra.mxu0 0
        %702 = vmatpush.bf16.msra.mxu0 %v667
        %703 = vmatmul.bf16.gmra.mxu0 %v658
        %v704 = vpop.f32.mrf.mxu0
        %v705 = vadd.f32 0.0, %v704
        %v706 = vpop.f32.mrf.mxu0
        %707 = vdwg.mxu0
        %v708 = vld [vmem:[#allocation2] sm:$0xff]
        %v709 = vld [vmem:[#allocation2 + $0x8] sm:$0xff]
        %v710 = vld [vmem:[#allocation2 + $0x10] sm:$0xff]
        %v711 = vadd.f32 %v708, %v679
        %v712 = vadd.f32 %v709, %v692
        %v713 = vadd.f32 %v710, %v705
        %714 = vst [vmem:[#allocation2] sm:$0xff] %v711
        %715 = vst [vmem:[#allocation2 + $0x8] sm:$0xff] %v712
        %716 = vst [vmem:[#allocation2 + $0x10] sm:$0xff] %v713
        %v717 = vld [vmem:[%s229] sm:$0xff]
        %s718 = scalar_lea.vmem %s224, 24
        %v719 = vld [vmem:[%s718] sm:$0xf]
        %721 = vst [vmem:[#allocation1] ss:$4 sm:$0xff] %v717
        %v722 = vld.sshfl [vmem:[#allocation1] sm:$0xff pattern:$0x73625140]
        %v724 = vld.sshfl [vmem:[#allocation1 + $0x8] sm:$0xff pattern:$0x73625140]
        %v726 = vld.sshfl [vmem:[#allocation1 + $0x10] sm:$0xff pattern:$0x73625140]
        %v728 = vld.sshfl [vmem:[#allocation1 + $0x18] sm:$0xff pattern:$0x73625140]
        %730 = vrot.lane.b32.xlu0 %v722, 92
        %v731 = vpop.permute.xlu0 %730
        %732 = vrot.lane.b32.xlu0 %v724, 92
        %v733 = vpop.permute.xlu0 %732
        %734 = vrot.lane.b32.xlu0 %v726, 92
        %v735 = vpop.permute.xlu0 %734
        %736 = vrot.lane.b32.xlu0 %v728, 92
        %v737 = vpop.permute.xlu0 %736
        %vm738 = vcmask 752640
        %v739 = vsel %vm738, %v731, %v733
        %v740 = vsel %vm738, %v733, %v735
        %v741 = vsel %vm738, %v735, %v737
        %v743 = vsel %vm239, %v719, 0
        %v746 = vsel %vm243, %v739, 0
        %v749 = vsel %vm243, %v740, 0
        %v752 = vsel %vm243, %v741, 0
        %754 = vmatpush.bf16.msra.mxu0 0
        %755 = vmatpush.bf16.msra.mxu0 0
        %756 = vmatpush.bf16.msra.mxu0 0
        %757 = vmatpush.bf16.msra.mxu0 0
        %758 = vmatpush.bf16.msra.mxu0 0
        %759 = vmatpush.bf16.msra.mxu0 0
        %760 = vmatpush.bf16.msra.mxu0 0
        %761 = vmatpush.bf16.msra.mxu0 %v746
        %762 = vmatmul.bf16.gmra.mxu0 %v743
        %v763 = vpop.f32.mrf.mxu0
        %v764 = vadd.f32 0.0, %v763
        %v765 = vpop.f32.mrf.mxu0
        %766 = vdwg.mxu0
        %767 = vmatpush.bf16.msra.mxu0 0
        %768 = vmatpush.bf16.msra.mxu0 0
        %769 = vmatpush.bf16.msra.mxu0 0
        %770 = vmatpush.bf16.msra.mxu0 0
        %771 = vmatpush.bf16.msra.mxu0 0
        %772 = vmatpush.bf16.msra.mxu0 0
        %773 = vmatpush.bf16.msra.mxu0 0
        %774 = vmatpush.bf16.msra.mxu0 %v749
        %775 = vmatmul.bf16.gmra.mxu0 %v743
        %v776 = vpop.f32.mrf.mxu0
        %v777 = vadd.f32 0.0, %v776
        %v778 = vpop.f32.mrf.mxu0
        %779 = vdwg.mxu0
        %780 = vmatpush.bf16.msra.mxu0 0
        %781 = vmatpush.bf16.msra.mxu0 0
        %782 = vmatpush.bf16.msra.mxu0 0
        %783 = vmatpush.bf16.msra.mxu0 0
        %784 = vmatpush.bf16.msra.mxu0 0
        %785 = vmatpush.bf16.msra.mxu0 0
        %786 = vmatpush.bf16.msra.mxu0 0
        %787 = vmatpush.bf16.msra.mxu0 %v752
        %788 = vmatmul.bf16.gmra.mxu0 %v743
        %v789 = vpop.f32.mrf.mxu0
        %v790 = vadd.f32 0.0, %v789
        %v791 = vpop.f32.mrf.mxu0
        %792 = vdwg.mxu0
        %v793 = vld [vmem:[#allocation2] sm:$0xff]
        %v794 = vld [vmem:[#allocation2 + $0x8] sm:$0xff]
        %v795 = vld [vmem:[#allocation2 + $0x10] sm:$0xff]
        %v796 = vadd.f32 %v793, %v764
        %v797 = vadd.f32 %v794, %v777
        %v798 = vadd.f32 %v795, %v790
        %799 = vst [vmem:[#allocation2] sm:$0xff] %v796
        %800 = vst [vmem:[#allocation2 + $0x8] sm:$0xff] %v797
        %801 = vst [vmem:[#allocation2 + $0x10] sm:$0xff] %v798
        %v802 = vld [vmem:[%s229] sm:$0xff]
        %s803 = scalar_lea.vmem %s224, 28
        %v804 = vld [vmem:[%s803] sm:$0xf]
        %806 = vst [vmem:[#allocation1] ss:$4 sm:$0xff] %v802
        %v807 = vld.sshfl [vmem:[#allocation1] sm:$0xff pattern:$0x73625140]
        %v809 = vld.sshfl [vmem:[#allocation1 + $0x8] sm:$0xff pattern:$0x73625140]
        %v811 = vld.sshfl [vmem:[#allocation1 + $0x10] sm:$0xff pattern:$0x73625140]
        %v813 = vld.sshfl [vmem:[#allocation1 + $0x18] sm:$0xff pattern:$0x73625140]
        %815 = vrot.lane.b32.xlu0 %v807, 91
        %v816 = vpop.permute.xlu0 %815
        %817 = vrot.lane.b32.xlu0 %v809, 91
        %v818 = vpop.permute.xlu0 %817
        %819 = vrot.lane.b32.xlu0 %v811, 91
        %v820 = vpop.permute.xlu0 %819
        %821 = vrot.lane.b32.xlu0 %v813, 91
        %v822 = vpop.permute.xlu0 %821
        %vm823 = vcmask 744448
        %v824 = vsel %vm823, %v816, %v818
        %v825 = vsel %vm823, %v818, %v820
        %v826 = vsel %vm823, %v820, %v822
        %v828 = vsel %vm239, %v804, 0
        %v831 = vsel %vm243, %v824, 0
        %v834 = vsel %vm243, %v825, 0
        %v837 = vsel %vm243, %v826, 0
        %839 = vmatpush.bf16.msra.mxu0 0
        %840 = vmatpush.bf16.msra.mxu0 0
        %841 = vmatpush.bf16.msra.mxu0 0
        %842 = vmatpush.bf16.msra.mxu0 0
        %843 = vmatpush.bf16.msra.mxu0 0
        %844 = vmatpush.bf16.msra.mxu0 0
        %845 = vmatpush.bf16.msra.mxu0 0
        %846 = vmatpush.bf16.msra.mxu0 %v831
        %847 = vmatmul.bf16.gmra.mxu0 %v828
        %v848 = vpop.f32.mrf.mxu0
        %v849 = vadd.f32 0.0, %v848
        %v850 = vpop.f32.mrf.mxu0
        %851 = vdwg.mxu0
        %852 = vmatpush.bf16.msra.mxu0 0
        %853 = vmatpush.bf16.msra.mxu0 0
        %854 = vmatpush.bf16.msra.mxu0 0
        %855 = vmatpush.bf16.msra.mxu0 0
        %856 = vmatpush.bf16.msra.mxu0 0
        %857 = vmatpush.bf16.msra.mxu0 0
        %858 = vmatpush.bf16.msra.mxu0 0
        %859 = vmatpush.bf16.msra.mxu0 %v834
        %860 = vmatmul.bf16.gmra.mxu0 %v828
        %v861 = vpop.f32.mrf.mxu0
        %v862 = vadd.f32 0.0, %v861
        %v863 = vpop.f32.mrf.mxu0
        %864 = vdwg.mxu0
        %865 = vmatpush.bf16.msra.mxu0 0
        %866 = vmatpush.bf16.msra.mxu0 0
        %867 = vmatpush.bf16.msra.mxu0 0
        %868 = vmatpush.bf16.msra.mxu0 0
        %869 = vmatpush.bf16.msra.mxu0 0
        %870 = vmatpush.bf16.msra.mxu0 0
        %871 = vmatpush.bf16.msra.mxu0 0
        %872 = vmatpush.bf16.msra.mxu0 %v837
        %873 = vmatmul.bf16.gmra.mxu0 %v828
        %v874 = vpop.f32.mrf.mxu0
        %v875 = vadd.f32 0.0, %v874
        %v876 = vpop.f32.mrf.mxu0
        %877 = vdwg.mxu0
        %v878 = vld [vmem:[#allocation2] sm:$0xff]
        %v879 = vld [vmem:[#allocation2 + $0x8] sm:$0xff]
        %v880 = vld [vmem:[#allocation2 + $0x10] sm:$0xff]
        %v881 = vadd.f32 %v878, %v849
        %v882 = vadd.f32 %v879, %v862
        %v883 = vadd.f32 %v880, %v875
        %884 = vst [vmem:[#allocation2] sm:$0xff] %v881
        %885 = vst [vmem:[#allocation2 + $0x8] sm:$0xff] %v882
        %886 = vst [vmem:[#allocation2 + $0x10] sm:$0xff] %v883
        %v887 = vld [vmem:[%s229] sm:$0xff]
        %s888 = scalar_lea.vmem %s224, 32
        %v889 = vld [vmem:[%s888] sm:$0xf]
        %891 = vst [vmem:[#allocation1] ss:$4 sm:$0xff] %v887
        %v892 = vld.sshfl [vmem:[#allocation1] sm:$0xff pattern:$0x73625140]
        %v894 = vld.sshfl [vmem:[#allocation1 + $0x8] sm:$0xff pattern:$0x73625140]
        %v896 = vld.sshfl [vmem:[#allocation1 + $0x10] sm:$0xff pattern:$0x73625140]
        %v898 = vld.sshfl [vmem:[#allocation1 + $0x18] sm:$0xff pattern:$0x73625140]
        %900 = vrot.lane.b32.xlu0 %v892, 90
        %v901 = vpop.permute.xlu0 %900
        %902 = vrot.lane.b32.xlu0 %v894, 90
        %v903 = vpop.permute.xlu0 %902
        %904 = vrot.lane.b32.xlu0 %v896, 90
        %v905 = vpop.permute.xlu0 %904
        %906 = vrot.lane.b32.xlu0 %v898, 90
        %v907 = vpop.permute.xlu0 %906
        %vm908 = vcmask 736256
        %v909 = vsel %vm908, %v901, %v903
        %v910 = vsel %vm908, %v903, %v905
        %v911 = vsel %vm908, %v905, %v907
        %v913 = vsel %vm239, %v889, 0
        %v916 = vsel %vm243, %v909, 0
        %v919 = vsel %vm243, %v910, 0
        %v922 = vsel %vm243, %v911, 0
        %924 = vmatpush.bf16.msra.mxu0 0
        %925 = vmatpush.bf16.msra.mxu0 0
        %926 = vmatpush.bf16.msra.mxu0 0
        %927 = vmatpush.bf16.msra.mxu0 0
        %928 = vmatpush.bf16.msra.mxu0 0
        %929 = vmatpush.bf16.msra.mxu0 0
        %930 = vmatpush.bf16.msra.mxu0 0
        %931 = vmatpush.bf16.msra.mxu0 %v916
        %932 = vmatmul.bf16.gmra.mxu0 %v913
        %v933 = vpop.f32.mrf.mxu0
        %v934 = vadd.f32 0.0, %v933
        %v935 = vpop.f32.mrf.mxu0
        %936 = vdwg.mxu0
        %937 = vmatpush.bf16.msra.mxu0 0
        %938 = vmatpush.bf16.msra.mxu0 0
        %939 = vmatpush.bf16.msra.mxu0 0
        %940 = vmatpush.bf16.msra.mxu0 0
        %941 = vmatpush.bf16.msra.mxu0 0
        %942 = vmatpush.bf16.msra.mxu0 0
        %943 = vmatpush.bf16.msra.mxu0 0
        %944 = vmatpush.bf16.msra.mxu0 %v919
        %945 = vmatmul.bf16.gmra.mxu0 %v913
        %v946 = vpop.f32.mrf.mxu0
        %v947 = vadd.f32 0.0, %v946
        %v948 = vpop.f32.mrf.mxu0
        %949 = vdwg.mxu0
        %950 = vmatpush.bf16.msra.mxu0 0
        %951 = vmatpush.bf16.msra.mxu0 0
        %952 = vmatpush.bf16.msra.mxu0 0
        %953 = vmatpush.bf16.msra.mxu0 0
        %954 = vmatpush.bf16.msra.mxu0 0
        %955 = vmatpush.bf16.msra.mxu0 0
        %956 = vmatpush.bf16.msra.mxu0 0
        %957 = vmatpush.bf16.msra.mxu0 %v922
        %958 = vmatmul.bf16.gmra.mxu0 %v913
        %v959 = vpop.f32.mrf.mxu0
        %v960 = vadd.f32 0.0, %v959
        %v961 = vpop.f32.mrf.mxu0
        %962 = vdwg.mxu0
        %v963 = vld [vmem:[#allocation2] sm:$0xff]
        %v964 = vld [vmem:[#allocation2 + $0x8] sm:$0xff]
        %v965 = vld [vmem:[#allocation2 + $0x10] sm:$0xff]
        %v966 = vadd.f32 %v963, %v934
        %v967 = vadd.f32 %v964, %v947
        %v968 = vadd.f32 %v965, %v960
        %969 = vst [vmem:[#allocation2] sm:$0xff] %v966
        %970 = vst [vmem:[#allocation2 + $0x8] sm:$0xff] %v967
        %971 = vst [vmem:[#allocation2 + $0x10] sm:$0xff] %v968
        %v972 = vld [vmem:[#allocation2] sm:$0xff]
        %v973 = vld [vmem:[#allocation2 + $0x8] sm:$0xff]
        %v974 = vld [vmem:[#allocation2 + $0x10] sm:$0xff]
        %v975 = vld [vmem:[%s2] sm:$0xff]
        %977 = vset.pattern.permute.xlu0 0
        %978 = vperm.xlu0 %977, %v975
        %v979 = vpop.permute.xlu0 %978
        %v981 = vmul.f32 %v972, %v979
        %v982 = vmul.f32 %v973, %v979
        %v983 = vmul.f32 %v974, %v979
        %v984 = vld [vmem:[%s3] sm:$0xff]
        %986 = vset.pattern.permute.xlu0 0
        %987 = vperm.xlu0 %986, %v984
        %v988 = vpop.permute.xlu0 %987
        %v990 = vadd.f32 %v981, %v988
        %v991 = vadd.f32 %v982, %v988
        %v992 = vadd.f32 %v983, %v988
        %v993 = vmax.f32 %v990, 0.0
        %v994 = vmax.f32 %v991, 0.0
        %v995 = vmax.f32 %v992, 0.0
        %v996 = vpack.c.bf16 %v994, %v993
        %v997 = vpack.c.bf16 %v995, %v995
        %998 = vst [vmem:[%s219] sm:$0xff] %v996
        %999 = vst [vmem:[%s219 + $0x8] sm:$0xf] %v997
        %s1000 = sand.u32 %s134, 1
        %s1001 = scalar_lea.sflag [#allocation4], %s1000
        %s1002 = sand.u32 %s134, 1
        %s1003 = smul.addr %s1002, 12
        %s1004 = scalar_lea.vmem [#allocation3], %s1003
        // Predicated region
        $region37: #{tpu_custom_call.1} parent=35 // pred_check
          %p1005 = pneg %p144
        $region38: #{tpu_custom_call.1} parent=35 // pred_check_branch
          %1007 = sbr.rel (%p1005) target = $region40
        $region39: #{tpu_custom_call.1} parent=35 // pred_region
          %s1008 = smul.u32 3, %s23
          %1010 = vsyncadd %s1001, 0
          %s1011 = smul.addr %s22, 3
          %s1012 = sadd.s32 %s1008, %s1011
          %s1013 = smul.addr %s1012, 4
          %s1014 = scalar_lea.hbm %s4, %s1013
          %s1016 = sshll.u32 %s1004, 4
          %s1017 = int_to_ptr.vmem [resolvable:$true] %s1016
          %s1018 = sshll.u32 %s1014, 4
          %s1019 = int_to_ptr.hbm [resolvable:$true] %s1018
          %1021 = dma.vmem_to_hbm [thread:$0]  %s1017, 192, %s1019, %s1001
        $region40: #{tpu_custom_call.1} parent=35 // pred_fallthru
          _
      $region36: #{tpu_custom_call.1} parent=5 // pred_fallthru
        _
      %p1022 = scmp.le.s32.totalorder 2, %s13
      // Predicated region
      $region41: #{tpu_custom_call.1} parent=5 // pred_check
        %p1023 = pneg %p1022
      $region42: #{tpu_custom_call.1} parent=5 // pred_check_branch
        %1025 = sbr.rel (%p1023) target = $region44
      $region43: #{tpu_custom_call.1} parent=5 // pred_region
        %s1026 = ssub.s32 %s13, 2
        // Predicated region
        $region45: #{tpu_custom_call.1} parent=43 // pred_check
          %p1027 = pneg %p150
        $region46: #{tpu_custom_call.1} parent=43 // pred_check_branch
          %1029 = sbr.rel (%p1027) target = $region48
        $region47: #{tpu_custom_call.1} parent=43 // pred_region
          %s1030 = sand.u32 %s135, 1
          %s1031 = scalar_lea.sflag [#allocation4], %s1030
          %s1032 = sand.u32 %s135, 1
          %s1033 = smul.addr %s1032, 12
          %s1034 = scalar_lea.vmem [#allocation3], %s1033
          %1036 = dma.done %s1031, 192
        $region48: #{tpu_custom_call.1} parent=43 // pred_fallthru
          _
      $region44: #{tpu_custom_call.1} parent=5 // pred_fallthru
        _
    $region6: #{tpu_custom_call.1} parent=1 // loop_footer
      %s17 = sadd.s32 1, %s13
    $region7: #{tpu_custom_call.1} parent=1 // loop_footer_branch
      %12 = sbr.rel target = $region3
    $region8: #{tpu_custom_call.1} parent=1 // loop_exit
      _
    %1037 = vsyncpa [#allocation4], 1
    %s1038 = scalar_lea.sflag [#allocation4], 1
    %1039 = vsyncpa %s1038, 1

</llo_original>
